<compile_context>
chip_gen: v7x
topology: tpu7x:2x2x1
jax: 0.10.0
libtpu: 0.0.40
codegen_flags: <defaults>
</compile_context>

<pallas_src>
import functools
from typing import NamedTuple, Tuple

import numpy as np
import jax
import jax.numpy as jnp
from jax import lax
from jax.experimental import pallas as pl
from jax.experimental.pallas import tpu as pltpu


class StageMeta(NamedTuple):
    rows_out: int
    rows_in: int
    w_off: int
    b_off: int


class Layout(NamedTuple):
    n_nodes: int
    feat_len: int
    n_channels: int
    n_width: int
    p0: int
    lin_cols: int                 # n_channels * p0
    wa_off: int
    wb_off: int
    bf_off: int
    stages: Tuple[StageMeta, ...]
    r_final: int


# ------------------------------ fused kernel --------------------------------
def _fused_kernel(nid_ref, adj_ref, feat_ref, wb_ref, out_ref, *, L: Layout):
    p0 = L.p0
    num_stages = len(L.stages)

    # --- mean + gather(nid) as a (2, N) selector: row0 = 1/N, row1 = one-hot.
    #     (No h_nodes scratch, no unchecked dynamic VMEM read.)
    rows = lax.broadcasted_iota(jnp.int32, (2, L.n_nodes), 0)
    cols = lax.broadcasted_iota(jnp.int32, (2, L.n_nodes), 1)
    onehot = (cols == nid_ref[0]).astype(jnp.float32)
    sel = jnp.where(rows == 0, jnp.float32(1.0 / L.n_nodes), onehot)

    # --- EdgeGraphConv aggregation restricted to the 2 rows actually used ---
    # TODO(synk): EdgeGraphConv is not defined in the reference source; it is
    # modeled as dense edge-weighted neighbor aggregation + linear projection
    # (the projection itself is folded into the linear0 weights at prep time).
    sa = jnp.dot(sel, adj_ref[...], preferred_element_type=jnp.float32)     # (2, N)
    saf = jnp.dot(sa, feat_ref[...], preferred_element_type=jnp.float32)    # (2, F)

    # --- fused (egc projection + linear0) + ReLU -----------------------------
    wa = wb_ref[L.wa_off:L.wa_off + L.feat_len, 0:L.lin_cols]               # (F, C*P0)
    wb = wb_ref[L.wb_off:L.wb_off + L.feat_len, 0:L.lin_cols]               # (F, C*P0)
    bf = wb_ref[L.bf_off:L.bf_off + 1, 0:L.lin_cols]                        # (1, C*P0)
    y = (jnp.dot(saf[0:1, :], wa, preferred_element_type=jnp.float32)
         + jnp.dot(saf[1:2, :], wb, preferred_element_type=jnp.float32)
         + bf)
    y = jnp.maximum(y, 0.0)                                                 # (1, C*P0)

    # --- deconv stage 1: VPU broadcast-accumulate straight from y's lanes ---
    s0 = L.stages[0]
    x = wb_ref[s0.b_off:s0.b_off + s0.rows_out, 0:p0]                       # bias (R1,P0)
    for c in range(L.n_channels):
        wcol = wb_ref[s0.w_off:s0.w_off + s0.rows_out, c:c + 1]             # (R1, 1)
        x = x + wcol * y[:, c * p0:(c + 1) * p0]                            # (R1, P0)
    if num_stages > 1:
        x = jnp.maximum(x, 0.0)

    # --- remaining folded ConvTranspose2d stages (MXU), pixels stay on lanes -
    for idx in range(1, num_stages):
        s = L.stages[idx]
        w = wb_ref[s.w_off:s.w_off + s.rows_out, 0:s.rows_in]
        b = wb_ref[s.b_off:s.b_off + s.rows_out, 0:p0]
        x = jnp.dot(w, x, preferred_element_type=jnp.float32) + b
        if idx < num_stages - 1:
            x = jnp.maximum(x, 0.0)

    # --- lane-dense (r_final/2, 2*P0) repack + softmax (commutes with layout) -
    half = L.r_final // 2
    xw = jnp.concatenate([x[0:half, :], x[half:, :]], axis=1)               # (half, 2*P0)
    m = jnp.max(xw)
    e = jnp.exp(xw - m)
    out_ref[...] = e * (1.0 / jnp.sum(e))


# --------------------- one-time parameter packing (prep) --------------------
def _build_final_perm(n_width, num_deconvs):
    """perm[t] = flat index into the kernel's (4^K/2, 2*n_width^2) output whose
    value belongs at NCHW-flatten position t of the (1, f_width, f_width) map."""
    k = num_deconvs
    p0 = n_width * n_width
    rk = 4 ** k
    half = rk // 2
    f_width = n_width * (2 ** k)
    true_idx = np.empty((half, 2 * p0), dtype=np.int64)
    for row in range(half):
        for l in range(2 * p0):
            r = 2 * row + l // p0                     # original folded row (d_1..d_K)
            p = l % p0
            ds = [(r // (4 ** (k - 1 - s))) % 4 for s in range(k)]
            i, j = divmod(p, n_width)
            for d in ds:
                i = i * 2 + d // 2
                j = j * 2 + d % 2
            true_idx[row, l] = i * f_width + j
    return jnp.asarray(np.argsort(true_idx.ravel()), dtype=jnp.int32)


def prepare_params(params, n_channels, n_width, n_nodes):
    """Pack all weights once into a single lane-padded f32 blob + static layout."""
    feat_len = int(params["egc_w"].shape[0])
    p0 = n_width * n_width
    m = n_channels * p0
    lane_w = m

    egc_w = np.asarray(params["egc_w"], np.float64)
    egc_b = np.asarray(params["egc_b"], np.float64)
    w0a = np.asarray(params["w0a"], np.float64)
    w0b = np.asarray(params["w0b"], np.float64)
    b0 = np.asarray(params["b0"], np.float64)

    blocks = []
    cur = 0

    def add(arr):
        nonlocal cur
        arr = np.asarray(arr, np.float64)
        r = arr.shape[0]
        r_pad = -(-r // 8) * 8                        # keep every block 8-row aligned
        buf = np.zeros((r_pad, lane_w), np.float32)
        buf[:r, :arr.shape[1]] = arr
        off = cur
        blocks.append(buf)
        cur += r_pad
        return off

    # Fold the (linear, pre-ReLU) EdgeGraphConv projection into linear0.
    wa_off = add(egc_w @ w0a)                                     # (F, m)
    wb_off = add(egc_w @ w0b)                                     # (F, m)
    bf_off = add(egc_b @ (w0a + w0b) + b0)                        # (1, m)

    # Folded ConvTranspose2d(k=2, s=2) chain: kron(I, Wt) block-diagonal
    # matrices, per-row biases pre-broadcast to the pixel width.  The last
    # stage's rows are pre-permuted (even rows first) so the kernel can emit
    # a lane-dense (r_final/2, 2*p0) result.
    stages = []
    r_prev, c_in = n_channels, n_channels
    num_stages = len(params["deconvs"])
    assert num_stages >= 1, "expected at least one deconv stage (n_channels >= 2)"
    for si, (w, b) in enumerate(params["deconvs"]):
        w = np.asarray(w, np.float64)
        b = np.asarray(b, np.float64)
        c_out = w.shape[1]
        group = r_prev // c_in
        wt = np.transpose(w, (2, 3, 1, 0)).reshape(4 * c_out, c_in)
        wbig = np.kron(np.eye(group), wt)                         # (group*4*c_out, r_prev)
        brow = np.tile(b, group * 4)                              # (group*4*c_out,)
        rows_out = group * 4 * c_out
        if si == num_stages - 1:
            rowperm = np.concatenate([np.arange(0, rows_out, 2),
                                      np.arange(1, rows_out, 2)])
            wbig = wbig[rowperm]
            brow = brow[rowperm]
        w_off = add(wbig)
        b_off = add(np.broadcast_to(brow[:, None], (rows_out, p0)))
        stages.append(StageMeta(rows_out=rows_out, rows_in=r_prev,
                                w_off=w_off, b_off=b_off))
        r_prev, c_in = rows_out, c_out

    blob = jnp.asarray(np.concatenate(blocks, axis=0), jnp.float32)
    layout = Layout(n_nodes=n_nodes, feat_len=feat_len, n_channels=n_channels,
                    n_width=n_width, p0=p0, lin_cols=m,
                    wa_off=wa_off, wb_off=wb_off, bf_off=bf_off,
                    stages=tuple(stages), r_final=r_prev)
    perm = _build_final_perm(n_width, num_stages)
    return blob, perm, layout


# ------------------------------- full forward -------------------------------
@functools.partial(jax.jit, static_argnames=("layout",))
def reticle_place_net_forward(blob, perm, adj, feat, nid, *, layout):
    half = layout.r_final // 2
    vmem = pl.BlockSpec(memory_space=pltpu.MemorySpace.VMEM)
    smem = pl.BlockSpec(memory_space=pltpu.MemorySpace.SMEM)
    kernel = functools.partial(_fused_kernel, L=layout)

    folded = pl.pallas_call(
        kernel,
        out_shape=jax.ShapeDtypeStruct((half, 2 * layout.p0), jnp.float32),
        in_specs=[smem, vmem, vmem, vmem],
        out_specs=vmem,
    )(nid, adj, feat, blob)

    # One static gather restores torch's NCHW .flatten() ordering.
    # TODO(synk): downstream consumers could index with `perm` directly to
    # drop this extra (tiny) XLA gather from the latency path.
    return jnp.take(folded.reshape(-1), perm)


# --------------------------- pure-JAX reference -----------------------------
def reference_forward(params, adj, feat, nid, n_channels, n_width):
    hp = jnp.dot(adj, feat, precision="highest")
    h_nodes = jnp.dot(hp, params["egc_w"], precision="highest") + params["egc_b"]
    f_mean = jnp.mean(h_nodes, axis=0)
    f_node = h_nodes[nid]
    w0 = jnp.concatenate([params["w0a"], params["w0b"]], axis=0)
    h = jnp.dot(jnp.concatenate([f_mean, f_node]), w0, precision="highest") + params["b0"][0]
    h = jnp.maximum(h, 0.0)
    x = h.reshape(n_channels, n_width, n_width)
    n_dec = len(params["deconvs"])
    for idx, (w, b) in enumerate(params["deconvs"]):
        c_out = w.shape[1]
        hh, ww = x.shape[1], x.shape[2]
        y = jnp.einsum("cij,cokl->oikjl", x, w, precision="highest")
        x = y.reshape(c_out, 2 * hh, 2 * ww) + b[:, None, None]
        if idx < n_dec - 1:
            x = jnp.maximum(x, 0.0)
    return jax.nn.softmax(x.reshape(-1))


if __name__ == "__main__":
    feat_len, n_channels, n_width = 32, 4, 8
    n_nodes = 8
    key = jax.random.PRNGKey(0)
    ks = jax.random.split(key, 8)

    # Graph as dense edge-weight adjacency + node feature matrix.
    adj = jax.random.normal(ks[0], (n_nodes, n_nodes), jnp.float32)
    feat = jax.random.normal(ks[1], (n_nodes, feat_len), jnp.float32)
    nid = jnp.array([3], dtype=jnp.int32)

    m = n_channels * n_width * n_width
    params = {
        "egc_w": 0.1 * jax.random.normal(ks[2], (feat_len, feat_len), jnp.float32),
        "egc_b": 0.1 * jax.random.normal(ks[3], (1, feat_len), jnp.float32),
        "w0a": 0.1 * jax.random.normal(ks[4], (feat_len, m), jnp.float32),
        "w0b": 0.1 * jax.random.normal(ks[5], (feat_len, m), jnp.float32),
        "b0": 0.1 * jax.random.normal(ks[6], (1, m), jnp.float32),
    }
    deconvs = []
    nc = n_channels
    dkeys = jax.random.split(ks[7], 8)
    di = 0
    while nc > 1:
        w = 0.1 * jax.random.normal(dkeys[di], (nc, nc // 2, 2, 2), jnp.float32)
        b = 0.1 * jax.random.normal(dkeys[di + 1], (nc // 2,), jnp.float32)
        deconvs.append((w, b))
        nc //= 2
        di += 2
    params["deconvs"] = deconvs

    blob, perm, layout = prepare_params(params, n_channels, n_width, n_nodes)

    out = reticle_place_net_forward(blob, perm, adj, feat, nid, layout=layout)
    out = jax.block_until_ready(out)

    ref = reference_forward(params, adj, feat, int(nid[0]), n_channels, n_width)

    f_width = n_width * (2 ** len(deconvs))
    assert out.shape == (f_width * f_width,), out.shape
    assert bool(jnp.all(jnp.isfinite(out)))
    assert abs(float(jnp.sum(out)) - 1.0) < 1e-4
    max_diff = float(jnp.max(jnp.abs(out - ref)))
    assert max_diff < 1e-4, f"mismatch vs reference: {max_diff}"
    print("KERNEL_OK")
</pallas_src>

<mosaic_0001>
module attributes {stable_mosaic.version = 11 : i64} {
  func.func @_fused_kernel(%arg0: memref<1xi32, #tpu.memory_space<smem>>, %arg1: memref<8x8xf32, #tpu.memory_space<vmem>>, %arg2: memref<8x32xf32, #tpu.memory_space<vmem>>, %arg3: memref<120x256xf32, #tpu.memory_space<vmem>>, %arg4: memref<8x128xf32, #tpu.memory_space<vmem>>) attributes {dimension_semantics = [], scalar_prefetch = 0 : i64, scratch_operands = 0 : i64, tpu.core_type = #tpu.core_type<tc>} {
    %0 = tpu.iota {dimensions = array<i32: 0>} : vector<2x8xi32>
    %1 = tpu.iota {dimensions = array<i32: 1>} : vector<2x8xi32>
    %c0 = arith.constant 0 : index
    %2 = memref.load %arg0[%c0] : memref<1xi32, #tpu.memory_space<smem>>
    %3 = vector.broadcast %2 : i32 to vector<2x8xi32>
    %4 = arith.cmpi eq, %1, %3 : vector<2x8xi32>
    %5 = arith.extui %4 : vector<2x8xi1> to vector<2x8xi32>
    %6 = arith.sitofp %5 : vector<2x8xi32> to vector<2x8xf32>
    %c0_i32 = arith.constant 0 : i32
    %7 = vector.broadcast %c0_i32 : i32 to vector<2x8xi32>
    %8 = arith.cmpi eq, %0, %7 : vector<2x8xi32>
    %cst = arith.constant 1.250000e-01 : f32
    %9 = vector.broadcast %cst : f32 to vector<2x8xf32>
    %10 = arith.select %8, %9, %6 : vector<2x8xi1>, vector<2x8xf32>
    %c0_0 = arith.constant 0 : index
    %c0_1 = arith.constant 0 : index
    %11 = vector.load %arg1[%c0_0, %c0_1] : memref<8x8xf32, #tpu.memory_space<vmem>>, vector<8x8xf32>
    %cst_2 = arith.constant dense<0.000000e+00> : vector<2x8xf32>
    %12 = tpu.matmul %10, %11, %cst_2 {dimension_numbers = #tpu.dot_dimension_numbers<[1], [0], [0], [1], [0, 0, 1, 1], [], []>} : vector<2x8xf32>, vector<8x8xf32>, vector<2x8xf32> -> vector<2x8xf32>
    %c0_3 = arith.constant 0 : index
    %c0_4 = arith.constant 0 : index
    %13 = vector.load %arg2[%c0_3, %c0_4] : memref<8x32xf32, #tpu.memory_space<vmem>>, vector<8x32xf32>
    %cst_5 = arith.constant dense<0.000000e+00> : vector<2x32xf32>
    %14 = tpu.matmul %12, %13, %cst_5 {dimension_numbers = #tpu.dot_dimension_numbers<[1], [0], [0], [1], [0, 0, 1, 1], [], []>} : vector<2x8xf32>, vector<8x32xf32>, vector<2x32xf32> -> vector<2x32xf32>
    %c0_6 = arith.constant 0 : index
    %c0_7 = arith.constant 0 : index
    %15 = vector.load %arg3[%c0_6, %c0_7] : memref<120x256xf32, #tpu.memory_space<vmem>>, vector<32x256xf32>
    %c32 = arith.constant 32 : index
    %c0_8 = arith.constant 0 : index
    %16 = vector.load %arg3[%c32, %c0_8] : memref<120x256xf32, #tpu.memory_space<vmem>>, vector<32x256xf32>
    %c64 = arith.constant 64 : index
    %c0_9 = arith.constant 0 : index
    %17 = vector.load %arg3[%c64, %c0_9] : memref<120x256xf32, #tpu.memory_space<vmem>>, vector<1x256xf32>
    %18 = vector.extract_strided_slice %14 {offsets = [0, 0], sizes = [1, 32], strides = [1, 1]} : vector<2x32xf32> to vector<1x32xf32>
    %cst_10 = arith.constant dense<0.000000e+00> : vector<1x256xf32>
    %19 = tpu.matmul %18, %15, %cst_10 {dimension_numbers = #tpu.dot_dimension_numbers<[1], [0], [0], [1], [0, 0, 1, 1], [], []>} : vector<1x32xf32>, vector<32x256xf32>, vector<1x256xf32> -> vector<1x256xf32>
    %20 = vector.extract_strided_slice %14 {offsets = [1, 0], sizes = [1, 32], strides = [1, 1]} : vector<2x32xf32> to vector<1x32xf32>
    %cst_11 = arith.constant dense<0.000000e+00> : vector<1x256xf32>
    %21 = tpu.matmul %20, %16, %cst_11 {dimension_numbers = #tpu.dot_dimension_numbers<[1], [0], [0], [1], [0, 0, 1, 1], [], []>} : vector<1x32xf32>, vector<32x256xf32>, vector<1x256xf32> -> vector<1x256xf32>
    %22 = arith.addf %19, %21 : vector<1x256xf32>
    %23 = arith.addf %22, %17 : vector<1x256xf32>
    %cst_12 = arith.constant 0.000000e+00 : f32
    %24 = vector.broadcast %cst_12 : f32 to vector<1x256xf32>
    %25 = arith.maximumf %23, %24 : vector<1x256xf32>
    %c80 = arith.constant 80 : index
    %c0_13 = arith.constant 0 : index
    %26 = vector.load %arg3[%c80, %c0_13] : memref<120x256xf32, #tpu.memory_space<vmem>>, vector<8x64xf32>
    %c72 = arith.constant 72 : index
    %c0_14 = arith.constant 0 : index
    %27 = vector.load %arg3[%c72, %c0_14] : memref<120x256xf32, #tpu.memory_space<vmem>>, vector<8x1xf32>
    %28 = vector.extract_strided_slice %25 {offsets = [0, 0], sizes = [1, 64], strides = [1, 1]} : vector<1x256xf32> to vector<1x64xf32>
    %29 = vector.broadcast %27 : vector<8x1xf32> to vector<8x64xf32>
    %30 = vector.broadcast %28 : vector<1x64xf32> to vector<8x64xf32>
    %31 = arith.mulf %29, %30 : vector<8x64xf32>
    %32 = arith.addf %26, %31 : vector<8x64xf32>
    %c72_15 = arith.constant 72 : index
    %c1 = arith.constant 1 : index
    %33 = vector.load %arg3[%c72_15, %c1] : memref<120x256xf32, #tpu.memory_space<vmem>>, vector<8x1xf32>
    %34 = vector.extract_strided_slice %25 {offsets = [0, 64], sizes = [1, 64], strides = [1, 1]} : vector<1x256xf32> to vector<1x64xf32>
    %35 = vector.broadcast %33 : vector<8x1xf32> to vector<8x64xf32>
    %36 = vector.broadcast %34 : vector<1x64xf32> to vector<8x64xf32>
    %37 = arith.mulf %35, %36 : vector<8x64xf32>
    %38 = arith.addf %32, %37 : vector<8x64xf32>
    %c72_16 = arith.constant 72 : index
    %c2 = arith.constant 2 : index
    %39 = vector.load %arg3[%c72_16, %c2] : memref<120x256xf32, #tpu.memory_space<vmem>>, vector<8x1xf32>
    %40 = vector.extract_strided_slice %25 {offsets = [0, 128], sizes = [1, 64], strides = [1, 1]} : vector<1x256xf32> to vector<1x64xf32>
    %41 = vector.broadcast %39 : vector<8x1xf32> to vector<8x64xf32>
    %42 = vector.broadcast %40 : vector<1x64xf32> to vector<8x64xf32>
    %43 = arith.mulf %41, %42 : vector<8x64xf32>
    %44 = arith.addf %38, %43 : vector<8x64xf32>
    %c72_17 = arith.constant 72 : index
    %c3 = arith.constant 3 : index
    %45 = vector.load %arg3[%c72_17, %c3] : memref<120x256xf32, #tpu.memory_space<vmem>>, vector<8x1xf32>
    %46 = vector.extract_strided_slice %25 {offsets = [0, 192], sizes = [1, 64], strides = [1, 1]} : vector<1x256xf32> to vector<1x64xf32>
    %47 = vector.broadcast %45 : vector<8x1xf32> to vector<8x64xf32>
    %48 = vector.broadcast %46 : vector<1x64xf32> to vector<8x64xf32>
    %49 = arith.mulf %47, %48 : vector<8x64xf32>
    %50 = arith.addf %44, %49 : vector<8x64xf32>
    %cst_18 = arith.constant 0.000000e+00 : f32
    %51 = vector.broadcast %cst_18 : f32 to vector<8x64xf32>
    %52 = arith.maximumf %50, %51 : vector<8x64xf32>
    %c88 = arith.constant 88 : index
    %c0_19 = arith.constant 0 : index
    %53 = vector.load %arg3[%c88, %c0_19] : memref<120x256xf32, #tpu.memory_space<vmem>>, vector<16x8xf32>
    %c104 = arith.constant 104 : index
    %c0_20 = arith.constant 0 : index
    %54 = vector.load %arg3[%c104, %c0_20] : memref<120x256xf32, #tpu.memory_space<vmem>>, vector<16x64xf32>
    %cst_21 = arith.constant dense<0.000000e+00> : vector<16x64xf32>
    %55 = tpu.matmul %53, %52, %cst_21 {dimension_numbers = #tpu.dot_dimension_numbers<[1], [0], [0], [1], [0, 0, 1, 1], [], []>} : vector<16x8xf32>, vector<8x64xf32>, vector<16x64xf32> -> vector<16x64xf32>
    %56 = arith.addf %55, %54 : vector<16x64xf32>
    %57 = vector.extract_strided_slice %56 {offsets = [0, 0], sizes = [8, 64], strides = [1, 1]} : vector<16x64xf32> to vector<8x64xf32>
    %58 = vector.extract_strided_slice %56 {offsets = [8, 0], sizes = [8, 64], strides = [1, 1]} : vector<16x64xf32> to vector<8x64xf32>
    %59 = tpu.concatenate %57, %58 in 1 : vector<8x64xf32>, vector<8x64xf32> -> vector<8x128xf32>
    %60 = vector.shape_cast %59 : vector<8x128xf32> to vector<1x8x128xf32>
    %cst_22 = arith.constant dense<0xFF800000> : vector<1xf32>
    %61 = vector.multi_reduction <maximumf>, %60, %cst_22 [1, 2] : vector<1x8x128xf32> to vector<1xf32>
    %62 = vector.shape_cast %61 : vector<1xf32> to vector<1x1x1xf32>
    %63 = vector.extract %62[0, 0, 0] : f32 from vector<1x1x1xf32>
    %64 = vector.broadcast %63 : f32 to vector<8x128xf32>
    %65 = arith.subf %59, %64 : vector<8x128xf32>
    %66 = math.exp %65 : vector<8x128xf32>
    %67 = vector.shape_cast %66 : vector<8x128xf32> to vector<1x8x128xf32>
    %cst_23 = arith.constant dense<0.000000e+00> : vector<1xf32>
    %68 = vector.multi_reduction <add>, %67, %cst_23 [1, 2] : vector<1x8x128xf32> to vector<1xf32>
    %69 = vector.shape_cast %68 : vector<1xf32> to vector<1x1x1xf32>
    %70 = vector.extract %69[0, 0, 0] : f32 from vector<1x1x1xf32>
    %cst_24 = arith.constant 1.000000e+00 : f32
    %71 = arith.divf %cst_24, %70 : f32
    %72 = vector.broadcast %71 : f32 to vector<8x128xf32>
    %73 = arith.mulf %66, %72 : vector<8x128xf32>
    %c0_25 = arith.constant 0 : index
    %c0_26 = arith.constant 0 : index
    %74 = vector.load %arg4[%c0_25, %c0_26] : memref<8x128xf32, #tpu.memory_space<vmem>>, vector<8x128xf32>
    tpu.vector_store %arg4[%c0_25, %c0_26], %73 {strides = array<i32>} : memref<8x128xf32, #tpu.memory_space<vmem>>, vector<8x128xf32>,
    return
  }
}

</mosaic_0001>

<llo_original>
// kernel: reticle_place_net_forward.1
$region0: #{reticle_place_net_forward.1}
  #allocation0 [shape = 'u32[]', space=smem, size = 0x4, offset = 0x4, fixed_abs, tag = 'smem constant byte address 0x4 - core index']
  #allocation1 [shape = 'u32[144,128]{1,0:T(1,128)}', space=vmem, size = 0x12000, scoped, tag = 'internal scratch']
  #allocation2 [shape = 's32[1]{0:T(128)S(6)}', space=smem, size = 0x200, scoped, tag = 'scoped memory for reticle_place_net_forward.1']
  %s0 = inlined_call_operand.<no memory space> [shape: s32[1], index: 0, kind: input, shape index: {}]
  %s1 = inlined_call_operand.hbm [shape: f32[8,8], index: 1, kind: input, shape index: {}]
  %s2 = inlined_call_operand.vmem [shape: f32[8,32], index: 2, kind: input, shape index: {}]
  %s3 = inlined_call_operand.hbm [shape: f32[120,256], index: 3, kind: input, shape index: {}]
  %s4 = inlined_call_operand.vmem [shape: f32[8,128], index: 4, kind: output, shape index: {}]
  %s5 = sld [smem:[#allocation0]]
  $region34: #{reticle_place_net_forward.1} parent=0
    _
  %s7 = ssub.s32 1, %s5
  %s8 = scalar_select 0, %s7, %s5
  %9 = sst [smem:[#allocation2]] %s0
  $region1: #{reticle_place_net_forward.1} parent=0
    #allocation3 [shape = 'u8[4096]{0}', space=vmem, size = 0x1000, scoped, tag = 'input window, operand 1, single buffered']
    #allocation4 [shape = 's32[1]{0}', space=sflag, size = 0x4, scoped, tag = 'scoped memory for reticle_place_net_forward.1']
    #allocation5 [shape = 'u8[122880]{0}', space=vmem, size = 0x1e000, scoped, tag = 'input window, operand 3, single buffered']
    #allocation6 [shape = 's32[1]{0}', space=sflag, size = 0x4, scoped, tag = 'scoped memory for reticle_place_net_forward.1']
    %10 = vsyncpa [#allocation4], 0
    %11 = vsyncpa [#allocation6], 0
    // Predicated region
    $region2: #{reticle_place_net_forward.1} parent=1 // pred_check
      _
    $region3: #{reticle_place_net_forward.1} parent=1 // pred_check_branch
      %13 = sbr.rel (0) target = $region5
    $region4: #{reticle_place_net_forward.1} parent=1 // pred_region
      _
    $region5: #{reticle_place_net_forward.1} parent=1 // pred_fallthru
      _
    // Predicated region
    $region6: #{reticle_place_net_forward.1} parent=1 // pred_check
      _
    $region7: #{reticle_place_net_forward.1} parent=1 // pred_check_branch
      %15 = sbr.rel (0) target = $region9
    $region8: #{reticle_place_net_forward.1} parent=1 // pred_region
      %s17 = ssub.s32 128, 128
      %18 = vsyncadd [#allocation4], %s17
      %s20 = sshll.u32 [#allocation3], 4
      %s21 = int_to_ptr.vmem [resolvable:$true] %s20
      %23 = dma.hbm_to_vmem [thread:$0]  %s1, 128, %s21, [#allocation4]
    $region9: #{reticle_place_net_forward.1} parent=1 // pred_fallthru
      _
    // Predicated region
    $region10: #{reticle_place_net_forward.1} parent=1 // pred_check
      _
    $region11: #{reticle_place_net_forward.1} parent=1 // pred_check_branch
      %25 = sbr.rel (0) target = $region13
    $region12: #{reticle_place_net_forward.1} parent=1 // pred_region
      _
    $region13: #{reticle_place_net_forward.1} parent=1 // pred_fallthru
      _
    // Predicated region
    $region14: #{reticle_place_net_forward.1} parent=1 // pred_check
      _
    $region15: #{reticle_place_net_forward.1} parent=1 // pred_check_branch
      %27 = sbr.rel (0) target = $region17
    $region16: #{reticle_place_net_forward.1} parent=1 // pred_region
      %s29 = ssub.s32 3840, 3840
      %30 = vsyncadd [#allocation6], %s29
      %s31 = sshll.u32 [#allocation5], 4
      %s32 = int_to_ptr.vmem [resolvable:$true] %s31
      %37 = dma.hbm_to_vmem [thread:$0]  %s3, 3840, %s32, [#allocation6], 256, 256, 16
    $region17: #{reticle_place_net_forward.1} parent=1 // pred_fallthru
      _
    // Predicated region
    $region18: #{reticle_place_net_forward.1} parent=1 // pred_check
      _
    $region19: #{reticle_place_net_forward.1} parent=1 // pred_check_branch
      %39 = sbr.rel (0) target = $region21
    $region20: #{reticle_place_net_forward.1} parent=1 // pred_region
      %40 = dma.done [#allocation4], 128
    $region21: #{reticle_place_net_forward.1} parent=1 // pred_fallthru
      _
    // Predicated region
    $region22: #{reticle_place_net_forward.1} parent=1 // pred_check
      _
    $region23: #{reticle_place_net_forward.1} parent=1 // pred_check_branch
      %42 = sbr.rel (0) target = $region25
    $region24: #{reticle_place_net_forward.1} parent=1 // pred_region
      %43 = dma.done [#allocation6], 3840
    $region25: #{reticle_place_net_forward.1} parent=1 // pred_fallthru
      _
    %v44 = vlaneseq
    %v45 = vshrl.u32 %v44, 7
    %v46 = vlaneseq
    %v47 = vand.u32 %v46, 127
    %s48 = sld [smem:[#allocation2]]
    %v49 = vstv %s48
    %vm50 = vcmp.eq.s32.totalorder %v47, %v49
    %v51 = vsel %vm50, 1, 0
    %v52 = vcvt.s32.f32 %v51
    %vm53 = vcmp.eq.s32.totalorder %v45, 0
    %v54 = vsel %vm53, 0.125, %v52
    %v55 = vld [vmem:[#allocation3] sm:$0xff]
    %vm56 = vcmask 64512
    %v58 = vsel %vm56, %v54, 0
    %60 = vmatprep.subr.mxu0 0.0
    %61 = vmatpush1.msra.mxu0 %v55
    %62 = vmatprep.subr.mxu0 0.0
    %63 = vmatpush1.msra.mxu0 0.0
    %64 = vmatprep.subr.mxu0 0.0
    %65 = vmatpush1.msra.mxu0 0.0
    %66 = vmatprep.subr.mxu0 0.0
    %67 = vmatpush1.msra.mxu0 0.0
    %68 = vmatprep.subr.mxu0 0.0
    %69 = vmatpush1.msra.mxu0 0.0
    %70 = vmatprep.subr.mxu0 0.0
    %71 = vmatpush1.msra.mxu0 0.0
    %72 = vmatprep.subr.mxu0 0.0
    %73 = vmatpush1.msra.mxu0 0.0
    %74 = vmatprep.subr.mxu0 0.0
    %75 = vmatpush1.msra.mxu0 0.0
    %76 = vmatprep.subr.mxu0 0.0
    %77 = vmatpush1.msra.mxu0 0.0
    %78 = vmatprep.subr.mxu0 0.0
    %79 = vmatpush1.msra.mxu0 0.0
    %80 = vmatprep.subr.mxu0 0.0
    %81 = vmatpush1.msra.mxu0 0.0
    %82 = vmatprep.subr.mxu0 0.0
    %83 = vmatpush1.msra.mxu0 0.0
    %84 = vmatprep.subr.mxu0 0.0
    %85 = vmatpush1.msra.mxu0 0.0
    %86 = vmatprep.subr.mxu0 0.0
    %87 = vmatpush1.msra.mxu0 0.0
    %88 = vmatprep.subr.mxu0 0.0
    %89 = vmatpush1.msra.mxu0 0.0
    %90 = vmatprep.subr.mxu0 0.0
    %91 = vmatpush1.msra.mxu0 0.0
    %92 = vmatprep.subr.mxu0 0.0
    %93 = vmatpush1.msra.mxu0 0.0
    %94 = vmatprep.subr.mxu0 0.0
    %95 = vmatpush1.msra.mxu0 0.0
    %96 = vmatprep.subr.mxu0 0.0
    %97 = vmatpush1.msra.mxu0 0.0
    %98 = vmatprep.subr.mxu0 0.0
    %99 = vmatpush1.msra.mxu0 0.0
    %100 = vmatprep.subr.mxu0 0.0
    %101 = vmatpush1.msra.mxu0 0.0
    %102 = vmatprep.subr.mxu0 0.0
    %103 = vmatpush1.msra.mxu0 0.0
    %104 = vmatprep.subr.mxu0 0.0
    %105 = vmatpush1.msra.mxu0 0.0
    %106 = vmatprep.subr.mxu0 0.0
    %107 = vmatpush1.msra.mxu0 0.0
    %108 = vmatprep.subr.mxu0 0.0
    %109 = vmatpush1.msra.mxu0 0.0
    %110 = vmatprep.subr.mxu0 0.0
    %111 = vmatpush1.msra.mxu0 0.0
    %112 = vmatprep.subr.mxu0 0.0
    %113 = vmatpush1.msra.mxu0 0.0
    %114 = vmatprep.subr.mxu0 0.0
    %115 = vmatpush1.msra.mxu0 0.0
    %116 = vmatprep.subr.mxu0 0.0
    %117 = vmatpush1.msra.mxu0 0.0
    %118 = vmatprep.subr.mxu0 0.0
    %119 = vmatpush1.msra.mxu0 0.0
    %120 = vmatprep.subr.mxu0 0.0
    %121 = vmatpush1.msra.mxu0 0.0
    %122 = vmatprep.subr.mxu0 0.0
    %123 = vmatpush1.msra.mxu0 0.0
    %124 = vmatprep.mubr.f32.mxu0 0.0
    %125 = vmatmul.mubr.f32.gmra.mrb[0].mxu0 %v58
    %v126 = vpop.f32.mrb[0].mxu0
    %v127 = vadd.f32 0.0, %v126
    %v128 = vpop.f32.mrb[0].mxu0
    %129 = vdwg.mxu0
    %v130 = vld [vmem:[%s2] sm:$0xff]
    %v132 = vsel %vm56, %v127, 0
    %134 = vmatprep.subr.mxu0 0.0
    %135 = vmatpush1.msra.mxu0 %v130
    %136 = vmatprep.subr.mxu0 0.0
    %137 = vmatpush1.msra.mxu0 0.0
    %138 = vmatprep.subr.mxu0 0.0
    %139 = vmatpush1.msra.mxu0 0.0
    %140 = vmatprep.subr.mxu0 0.0
    %141 = vmatpush1.msra.mxu0 0.0
    %142 = vmatprep.subr.mxu0 0.0
    %143 = vmatpush1.msra.mxu0 0.0
    %144 = vmatprep.subr.mxu0 0.0
    %145 = vmatpush1.msra.mxu0 0.0
    %146 = vmatprep.subr.mxu0 0.0
    %147 = vmatpush1.msra.mxu0 0.0
    %148 = vmatprep.subr.mxu0 0.0
    %149 = vmatpush1.msra.mxu0 0.0
    %150 = vmatprep.subr.mxu0 0.0
    %151 = vmatpush1.msra.mxu0 0.0
    %152 = vmatprep.subr.mxu0 0.0
    %153 = vmatpush1.msra.mxu0 0.0
    %154 = vmatprep.subr.mxu0 0.0
    %155 = vmatpush1.msra.mxu0 0.0
    %156 = vmatprep.subr.mxu0 0.0
    %157 = vmatpush1.msra.mxu0 0.0
    %158 = vmatprep.subr.mxu0 0.0
    %159 = vmatpush1.msra.mxu0 0.0
    %160 = vmatprep.subr.mxu0 0.0
    %161 = vmatpush1.msra.mxu0 0.0
    %162 = vmatprep.subr.mxu0 0.0
    %163 = vmatpush1.msra.mxu0 0.0
    %164 = vmatprep.subr.mxu0 0.0
    %165 = vmatpush1.msra.mxu0 0.0
    %166 = vmatprep.subr.mxu0 0.0
    %167 = vmatpush1.msra.mxu0 0.0
    %168 = vmatprep.subr.mxu0 0.0
    %169 = vmatpush1.msra.mxu0 0.0
    %170 = vmatprep.subr.mxu0 0.0
    %171 = vmatpush1.msra.mxu0 0.0
    %172 = vmatprep.subr.mxu0 0.0
    %173 = vmatpush1.msra.mxu0 0.0
    %174 = vmatprep.subr.mxu0 0.0
    %175 = vmatpush1.msra.mxu0 0.0
    %176 = vmatprep.subr.mxu0 0.0
    %177 = vmatpush1.msra.mxu0 0.0
    %178 = vmatprep.subr.mxu0 0.0
    %179 = vmatpush1.msra.mxu0 0.0
    %180 = vmatprep.subr.mxu0 0.0
    %181 = vmatpush1.msra.mxu0 0.0
    %182 = vmatprep.subr.mxu0 0.0
    %183 = vmatpush1.msra.mxu0 0.0
    %184 = vmatprep.subr.mxu0 0.0
    %185 = vmatpush1.msra.mxu0 0.0
    %186 = vmatprep.subr.mxu0 0.0
    %187 = vmatpush1.msra.mxu0 0.0
    %188 = vmatprep.subr.mxu0 0.0
    %189 = vmatpush1.msra.mxu0 0.0
    %190 = vmatprep.subr.mxu0 0.0
    %191 = vmatpush1.msra.mxu0 0.0
    %192 = vmatprep.subr.mxu0 0.0
    %193 = vmatpush1.msra.mxu0 0.0
    %194 = vmatprep.subr.mxu0 0.0
    %195 = vmatpush1.msra.mxu0 0.0
    %196 = vmatprep.subr.mxu0 0.0
    %197 = vmatpush1.msra.mxu0 0.0
    %198 = vmatprep.mubr.f32.mxu0 0.0
    %199 = vmatmul.mubr.f32.gmra.mrb[0].mxu0 %v132
    %v200 = vpop.f32.mrb[0].mxu0
    %v201 = vadd.f32 0.0, %v200
    %v202 = vpop.f32.mrb[0].mxu0
    %203 = vdwg.mxu0
    %v204 = vld [vmem:[#allocation5] sm:$0xff]
    %v205 = vld [vmem:[#allocation5 + $0x8] sm:$0xff]
    %v206 = vld [vmem:[#allocation5 + $0x10] sm:$0xff]
    %v207 = vld [vmem:[#allocation5 + $0x18] sm:$0xff]
    %v208 = vld [vmem:[#allocation5 + $0x20] sm:$0xff]
    %v209 = vld [vmem:[#allocation5 + $0x28] sm:$0xff]
    %v210 = vld [vmem:[#allocation5 + $0x30] sm:$0xff]
    %v211 = vld [vmem:[#allocation5 + $0x38] sm:$0xff]
    %v212 = vld [vmem:[#allocation5 + $0x40] sm:$0xff]
    %v213 = vld [vmem:[#allocation5 + $0x48] sm:$0xff]
    %v214 = vld [vmem:[#allocation5 + $0x50] sm:$0xff]
    %v215 = vld [vmem:[#allocation5 + $0x58] sm:$0xff]
    %v216 = vld [vmem:[#allocation5 + $0x60] sm:$0xff]
    %v217 = vld [vmem:[#allocation5 + $0x68] sm:$0xff]
    %v218 = vld [vmem:[#allocation5 + $0x70] sm:$0xff]
    %v219 = vld [vmem:[#allocation5 + $0x78] sm:$0xff]
    %s220 = scalar_lea.vmem [#allocation5], 128
    %v221 = vld [vmem:[%s220] ss:$8 sm:$0x3]
    %v223 = vrot.slane %v201, 1
    %vm224 = vcmask 261120
    %v225 = vsel %vm224, %v223, 0
    %227 = vmatprep.subr.mxu0 %v213
    %228 = vmatpush1.msra.mxu0 %v212
    %229 = vmatprep.subr.mxu0 %v215
    %230 = vmatpush1.msra.mxu0 %v214
    %231 = vmatprep.subr.mxu0 %v217
    %232 = vmatpush1.msra.mxu0 %v216
    %233 = vmatprep.subr.mxu0 %v219
    %234 = vmatpush1.msra.mxu0 %v218
    %235 = vmatprep.subr.mxu0 0.0
    %236 = vmatpush1.msra.mxu0 0.0
    %237 = vmatprep.subr.mxu0 0.0
    %238 = vmatpush1.msra.mxu0 0.0
    %239 = vmatprep.subr.mxu0 0.0
    %240 = vmatpush1.msra.mxu0 0.0
    %241 = vmatprep.subr.mxu0 0.0
    %242 = vmatpush1.msra.mxu0 0.0
    %243 = vmatprep.subr.mxu0 0.0
    %244 = vmatpush1.msra.mxu0 0.0
    %245 = vmatprep.subr.mxu0 0.0
    %246 = vmatpush1.msra.mxu0 0.0
    %247 = vmatprep.subr.mxu0 0.0
    %248 = vmatpush1.msra.mxu0 0.0
    %249 = vmatprep.subr.mxu0 0.0
    %250 = vmatpush1.msra.mxu0 0.0
    %251 = vmatprep.subr.mxu0 0.0
    %252 = vmatpush1.msra.mxu0 0.0
    %253 = vmatprep.subr.mxu0 0.0
    %254 = vmatpush1.msra.mxu0 0.0
    %255 = vmatprep.subr.mxu0 0.0
    %256 = vmatpush1.msra.mxu0 0.0
    %257 = vmatprep.subr.mxu0 0.0
    %258 = vmatpush1.msra.mxu0 0.0
    %259 = vmatprep.subr.mxu0 0.0
    %260 = vmatpush1.msra.mxu0 0.0
    %261 = vmatprep.subr.mxu0 0.0
    %262 = vmatpush1.msra.mxu0 0.0
    %263 = vmatprep.subr.mxu0 0.0
    %264 = vmatpush1.msra.mxu0 0.0
    %265 = vmatprep.subr.mxu0 0.0
    %266 = vmatpush1.msra.mxu0 0.0
    %267 = vmatprep.subr.mxu0 0.0
    %268 = vmatpush1.msra.mxu0 0.0
    %269 = vmatprep.subr.mxu0 0.0
    %270 = vmatpush1.msra.mxu0 0.0
    %271 = vmatprep.subr.mxu0 0.0
    %272 = vmatpush1.msra.mxu0 0.0
    %273 = vmatprep.subr.mxu0 0.0
    %274 = vmatpush1.msra.mxu0 0.0
    %275 = vmatprep.subr.mxu0 0.0
    %276 = vmatpush1.msra.mxu0 0.0
    %277 = vmatprep.subr.mxu0 0.0
    %278 = vmatpush1.msra.mxu0 0.0
    %279 = vmatprep.subr.mxu0 0.0
    %280 = vmatpush1.msra.mxu0 0.0
    %281 = vmatprep.subr.mxu0 0.0
    %282 = vmatpush1.msra.mxu0 0.0
    %283 = vmatprep.subr.mxu0 0.0
    %284 = vmatpush1.msra.mxu0 0.0
    %285 = vmatprep.subr.mxu0 0.0
    %286 = vmatpush1.msra.mxu0 0.0
    %287 = vmatprep.subr.mxu0 0.0
    %288 = vmatpush1.msra.mxu0 0.0
    %289 = vmatprep.subr.mxu0 0.0
    %290 = vmatpush1.msra.mxu0 0.0
    %291 = vmatprep.mubr.f32.mxu0 0.0
    %292 = vmatmul.mubr.f32.gmra.mrb[0].mxu0 %v225
    %v293 = vpop.f32.mrb[0].mxu0
    %v294 = vadd.f32 0.0, %v293
    %v295 = vpop.f32.mrb[0].mxu0
    %v296 = vadd.f32 0.0, %v295
    %297 = vdwg.mxu0
    %v298 = vsel %vm224, %v201, 0
    %300 = vmatprep.subr.mxu0 %v205
    %301 = vmatpush1.msra.mxu0 %v204
    %302 = vmatprep.subr.mxu0 %v207
    %303 = vmatpush1.msra.mxu0 %v206
    %304 = vmatprep.subr.mxu0 %v209
    %305 = vmatpush1.msra.mxu0 %v208
    %306 = vmatprep.subr.mxu0 %v211
    %307 = vmatpush1.msra.mxu0 %v210
    %308 = vmatprep.subr.mxu0 0.0
    %309 = vmatpush1.msra.mxu0 0.0
    %310 = vmatprep.subr.mxu0 0.0
    %311 = vmatpush1.msra.mxu0 0.0
    %312 = vmatprep.subr.mxu0 0.0
    %313 = vmatpush1.msra.mxu0 0.0
    %314 = vmatprep.subr.mxu0 0.0
    %315 = vmatpush1.msra.mxu0 0.0
    %316 = vmatprep.subr.mxu0 0.0
    %317 = vmatpush1.msra.mxu0 0.0
    %318 = vmatprep.subr.mxu0 0.0
    %319 = vmatpush1.msra.mxu0 0.0
    %320 = vmatprep.subr.mxu0 0.0
    %321 = vmatpush1.msra.mxu0 0.0
    %322 = vmatprep.subr.mxu0 0.0
    %323 = vmatpush1.msra.mxu0 0.0
    %324 = vmatprep.subr.mxu0 0.0
    %325 = vmatpush1.msra.mxu0 0.0
    %326 = vmatprep.subr.mxu0 0.0
    %327 = vmatpush1.msra.mxu0 0.0
    %328 = vmatprep.subr.mxu0 0.0
    %329 = vmatpush1.msra.mxu0 0.0
    %330 = vmatprep.subr.mxu0 0.0
    %331 = vmatpush1.msra.mxu0 0.0
    %332 = vmatprep.subr.mxu0 0.0
    %333 = vmatpush1.msra.mxu0 0.0
    %334 = vmatprep.subr.mxu0 0.0
    %335 = vmatpush1.msra.mxu0 0.0
    %336 = vmatprep.subr.mxu0 0.0
    %337 = vmatpush1.msra.mxu0 0.0
    %338 = vmatprep.subr.mxu0 0.0
    %339 = vmatpush1.msra.mxu0 0.0
    %340 = vmatprep.subr.mxu0 0.0
    %341 = vmatpush1.msra.mxu0 0.0
    %342 = vmatprep.subr.mxu0 0.0
    %343 = vmatpush1.msra.mxu0 0.0
    %344 = vmatprep.subr.mxu0 0.0
    %345 = vmatpush1.msra.mxu0 0.0
    %346 = vmatprep.subr.mxu0 0.0
    %347 = vmatpush1.msra.mxu0 0.0
    %348 = vmatprep.subr.mxu0 0.0
    %349 = vmatpush1.msra.mxu0 0.0
    %350 = vmatprep.subr.mxu0 0.0
    %351 = vmatpush1.msra.mxu0 0.0
    %352 = vmatprep.subr.mxu0 0.0
    %353 = vmatpush1.msra.mxu0 0.0
    %354 = vmatprep.subr.mxu0 0.0
    %355 = vmatpush1.msra.mxu0 0.0
    %356 = vmatprep.subr.mxu0 0.0
    %357 = vmatpush1.msra.mxu0 0.0
    %358 = vmatprep.subr.mxu0 0.0
    %359 = vmatpush1.msra.mxu0 0.0
    %360 = vmatprep.subr.mxu0 0.0
    %361 = vmatpush1.msra.mxu0 0.0
    %362 = vmatprep.subr.mxu0 0.0
    %363 = vmatpush1.msra.mxu0 0.0
    %364 = vmatprep.mubr.f32.mxu0 0.0
    %365 = vmatmul.mubr.f32.gmra.mrb[0].mxu0 %v298
    %v366 = vpop.f32.mrb[0].mxu0
    %v367 = vadd.f32 %v294, %v366
    %v368 = vpop.f32.mrb[0].mxu0
    %v369 = vadd.f32 %v296, %v368
    %370 = vdwg.mxu0
    %v372 = vlaneseq
    %v373 = vshrl.u32 %v372, 7
    %v374 = vsub.s32 0, %v373
    %v375 = vrot.slane %v221, %v374
    %v376 = vlaneseq
    %v377 = vshrl.u32 %v376, 7
    %v378 = vsub.s32 1, %v377
    %v379 = vrot.slane %v221, %v378
    %v382 = vadd.f32 %v367, %v375
    %v383 = vadd.f32 %v369, %v379
    %v384 = vmax.f32 %v382, 0.0
    %v385 = vmax.f32 %v383, 0.0
    %v386 = vld [vmem:[#allocation5 + $0xa0] sm:$0xff]
    %v387 = vld [vmem:[#allocation5 + $0x90] sm:$0xff]
    %389 = vset.pattern.permute.xlu0 0
    %390 = vperm.xlu0 %389, %v387
    %v391 = vpop.permute.xlu0 %390
    %v393 = vlaneseq
    %v394 = vshrl.u32 %v393, 7
    %v395 = vsub.s32 0, %v394
    %v396 = vrot.slane %v384, %v395
    %v397 = vmul.f32 %v391, %v396
    %v398 = vadd.f32 %v386, %v397
    %399 = vset.pattern.permute.xlu0 1
    %400 = vperm.xlu0 %399, %v387
    %v401 = vpop.permute.xlu0 %400
    %v403 = vmul.f32 %v401, %v396
    %405 = vrot.lane.b32.xlu0 %v403, 64
    %v406 = vpop.permute.xlu0 %405
    %v408 = vadd.f32 %v398, %v406
    %409 = vset.pattern.permute.xlu0 2
    %410 = vperm.xlu0 %409, %v387
    %v411 = vpop.permute.xlu0 %410
    %v413 = vlaneseq
    %v414 = vshrl.u32 %v413, 7
    %v415 = vsub.s32 0, %v414
    %v416 = vrot.slane %v385, %v415
    %v417 = vmul.f32 %v411, %v416
    %v418 = vadd.f32 %v408, %v417
    %419 = vset.pattern.permute.xlu0 3
    %420 = vperm.xlu0 %419, %v387
    %v421 = vpop.permute.xlu0 %420
    %v423 = vmul.f32 %v421, %v416
    %425 = vrot.lane.b32.xlu0 %v423, 64
    %v426 = vpop.permute.xlu0 %425
    %v428 = vadd.f32 %v418, %v426
    %v429 = vmax.f32 %v428, 0.0
    %v430 = vld [vmem:[#allocation5 + $0xb0] sm:$0xff]
    %v431 = vld [vmem:[#allocation5 + $0xc0] sm:$0xff]
    %v432 = vld [vmem:[#allocation5 + $0xd0] sm:$0xff]
    %v433 = vld [vmem:[#allocation5 + $0xe0] sm:$0xff]
    %v435 = vsel %vm56, %v430, 0
    %v438 = vsel %vm56, %v431, 0
    %440 = vmatprep.subr.mxu0 0.0
    %441 = vmatpush1.msra.mxu0 %v429
    %442 = vmatprep.subr.mxu0 0.0
    %443 = vmatpush1.msra.mxu0 0.0
    %444 = vmatprep.subr.mxu0 0.0
    %445 = vmatpush1.msra.mxu0 0.0
    %446 = vmatprep.subr.mxu0 0.0
    %447 = vmatpush1.msra.mxu0 0.0
    %448 = vmatprep.subr.mxu0 0.0
    %449 = vmatpush1.msra.mxu0 0.0
    %450 = vmatprep.subr.mxu0 0.0
    %451 = vmatpush1.msra.mxu0 0.0
    %452 = vmatprep.subr.mxu0 0.0
    %453 = vmatpush1.msra.mxu0 0.0
    %454 = vmatprep.subr.mxu0 0.0
    %455 = vmatpush1.msra.mxu0 0.0
    %456 = vmatprep.subr.mxu0 0.0
    %457 = vmatpush1.msra.mxu0 0.0
    %458 = vmatprep.subr.mxu0 0.0
    %459 = vmatpush1.msra.mxu0 0.0
    %460 = vmatprep.subr.mxu0 0.0
    %461 = vmatpush1.msra.mxu0 0.0
    %462 = vmatprep.subr.mxu0 0.0
    %463 = vmatpush1.msra.mxu0 0.0
    %464 = vmatprep.subr.mxu0 0.0
    %465 = vmatpush1.msra.mxu0 0.0
    %466 = vmatprep.subr.mxu0 0.0
    %467 = vmatpush1.msra.mxu0 0.0
    %468 = vmatprep.subr.mxu0 0.0
    %469 = vmatpush1.msra.mxu0 0.0
    %470 = vmatprep.subr.mxu0 0.0
    %471 = vmatpush1.msra.mxu0 0.0
    %472 = vmatprep.subr.mxu0 0.0
    %473 = vmatpush1.msra.mxu0 0.0
    %474 = vmatprep.subr.mxu0 0.0
    %475 = vmatpush1.msra.mxu0 0.0
    %476 = vmatprep.subr.mxu0 0.0
    %477 = vmatpush1.msra.mxu0 0.0
    %478 = vmatprep.subr.mxu0 0.0
    %479 = vmatpush1.msra.mxu0 0.0
    %480 = vmatprep.subr.mxu0 0.0
    %481 = vmatpush1.msra.mxu0 0.0
    %482 = vmatprep.subr.mxu0 0.0
    %483 = vmatpush1.msra.mxu0 0.0
    %484 = vmatprep.subr.mxu0 0.0
    %485 = vmatpush1.msra.mxu0 0.0
    %486 = vmatprep.subr.mxu0 0.0
    %487 = vmatpush1.msra.mxu0 0.0
    %488 = vmatprep.subr.mxu0 0.0
    %489 = vmatpush1.msra.mxu0 0.0
    %490 = vmatprep.subr.mxu0 0.0
    %491 = vmatpush1.msra.mxu0 0.0
    %492 = vmatprep.subr.mxu0 0.0
    %493 = vmatpush1.msra.mxu0 0.0
    %494 = vmatprep.subr.mxu0 0.0
    %495 = vmatpush1.msra.mxu0 0.0
    %496 = vmatprep.subr.mxu0 0.0
    %497 = vmatpush1.msra.mxu0 0.0
    %498 = vmatprep.subr.mxu0 0.0
    %499 = vmatpush1.msra.mxu0 0.0
    %500 = vmatprep.subr.mxu0 0.0
    %501 = vmatpush1.msra.mxu0 0.0
    %502 = vmatprep.subr.mxu0 0.0
    %503 = vmatpush1.msra.mxu0 0.0
    %504 = vmatprep.mubr.f32.mxu0 0.0
    %505 = vmatmul.mubr.f32.gmra.mrb[0].mxu0 %v435
    %v506 = vpop.f32.mrb[0].mxu0
    %v507 = vadd.f32 %v432, %v506
    %v508 = vpop.f32.mrb[0].mxu0
    %509 = vmatprep.mubr.f32.mxu0 0.0
    %510 = vmatmul.mubr.f32.gmra.mrb[0].mxu0 %v438
    %v511 = vpop.f32.mrb[0].mxu0
    %v512 = vadd.f32 %v433, %v511
    %v513 = vpop.f32.mrb[0].mxu0
    %514 = vdwg.mxu0
    %516 = vrot.lane.b32.xlu0 %v512, 64
    %v517 = vpop.permute.xlu0 %516
    %vm519 = vcmask 523264
    %v520 = vsel %vm519, %v507, %v517
    %521 = vmax.xlane.f32.xlu0 %v520
    %v522 = vpop.xlane.xlu0 %521
    %v523 = vrot.slane %v522, 4
    %v524 = vmax.f32 %v522, %v523
    %v525 = vrot.slane %v524, 2
    %v526 = vmax.f32 %v524, %v525
    %v527 = vrot.slane %v526, 1
    %v528 = vmax.f32 %v526, %v527
    %s529 = vtos %v528
    %v530 = vstv %s529
    %v531 = vsub.f32 %v520, %v530
    %v532 = vmul.f32 %v531, 1.442695
    %v533 = vpow.pop %v532
    %534 = vadd.xlane.f32.xlu0 %v533
    %v535 = vpop.xlane.xlu0 %534
    %v536 = vrot.slane %v535, 4
    %v537 = vadd.f32 %v535, %v536
    %v538 = vrot.slane %v537, 2
    %v539 = vadd.f32 %v537, %v538
    %v540 = vrot.slane %v539, 1
    %v541 = vadd.f32 %v539, %v540
    %s542 = vtos %v541
    %v543 = vstv %s542
    %v544 = vrcp.pop %v543
    %s545 = vtos %v544
    %v546 = vstv %s545
    %v547 = vmul.f32 %v533, %v546
    %548 = vst [vmem:[%s4] sm:$0xff] %v547
    // Predicated region
    $region26: #{reticle_place_net_forward.1} parent=1 // pred_check
      _
    $region27: #{reticle_place_net_forward.1} parent=1 // pred_check_branch
      %550 = sbr.rel (0) target = $region29
    $region28: #{reticle_place_net_forward.1} parent=1 // pred_region
      _
    $region29: #{reticle_place_net_forward.1} parent=1 // pred_fallthru
      _
    // Predicated region
    $region30: #{reticle_place_net_forward.1} parent=1 // pred_check
      _
    $region31: #{reticle_place_net_forward.1} parent=1 // pred_check_branch
      %552 = sbr.rel (0) target = $region33
    $region32: #{reticle_place_net_forward.1} parent=1 // pred_region
      _
    $region33: #{reticle_place_net_forward.1} parent=1 // pred_fallthru
      _
    %553 = vsyncpa [#allocation4], 1
    %554 = vsyncpa [#allocation6], 1

</llo_original>
